<compile_context>
chip_gen: v7x
topology: tpu7x:2x2x1
jax: 0.10.0
libtpu: 0.0.40
codegen_flags: <defaults>
</compile_context>

<pallas_src>
import functools
import math

import jax
import jax.numpy as jnp
from jax import lax
from jax.experimental import pallas as pl
from jax.experimental.pallas import tpu as pltpu


# ----------------------------------------------------------------------------
# Kernel
# ----------------------------------------------------------------------------
def _attention_kernel(*refs, norm_factor, tanh_clipping, has_mask, n_key,
                      compute_dtype):
    if has_mask:
        q_ref, k_ref, wq_ref, wk_ref, mask_ref, out_ref, kproj_ref = refs
    else:
        q_ref, k_ref, wq_ref, wk_ref, out_ref, kproj_ref = refs
        mask_ref = None

    bt, tq, d = q_ref.shape
    kp = kproj_ref.shape[1]  # (possibly 128-padded) key length

    # K projection: a single (BT*Kp, D) @ (D, D) matmul, once per batch tile.
    # NOTE: relies on the q axis (grid axis 1) being the innermost,
    # sequentially iterated ("arbitrary") axis so later q tiles reuse kproj.
    @pl.when(pl.program_id(1) == 0)
    def _project_k():
        wk = wk_ref[...].astype(compute_dtype)
        k_all = k_ref[...].astype(compute_dtype).reshape(bt * kp, d)
        kproj = jnp.dot(k_all, wk, preferred_element_type=jnp.float32)
        kproj_ref[...] = kproj.reshape(bt, kp, d).astype(compute_dtype)

    # Q projection: a single (BT*TQ, D) @ (D, D) matmul (fills the MXU M dim).
    wq = wq_ref[...].astype(compute_dtype)
    q_all = q_ref[...].astype(compute_dtype).reshape(bt * tq, d)
    Q = jnp.dot(q_all, wq, preferred_element_type=jnp.float32)
    # Scale the small (BT*TQ, D) Q instead of the (BT*TQ, Kp) scores.
    Q = (Q * norm_factor).astype(compute_dtype).reshape(bt, tq, d)

    # Scores: one batched dot_general contracting the last dims (no K.T).
    U = lax.dot_general(
        Q, kproj_ref[...],
        dimension_numbers=(((2,), (2,)), ((0,), (0,))),
        preferred_element_type=jnp.float32)            # (BT, TQ, Kp) f32

    # tanh clipping THEN mask fill (order matches the PyTorch module).
    U = tanh_clipping * jnp.tanh(U)
    if has_mask:
        # Compare the mask at its stored width; no widening to int32.
        U = jnp.where(mask_ref[...] == 1, jnp.float32(-100000000.0), U)
    if kp != n_key:
        # Lane-padding columns: strictly below the -1e8 mask fill so a fully
        # masked row still normalizes over the real n_key columns only.
        col = lax.broadcasted_iota(jnp.int32, U.shape, 2)
        U = jnp.where(col >= n_key, jnp.float32(-1e9), U)

    # Numerically stable log-softmax in f32.
    mmax = jnp.max(U, axis=-1, keepdims=True)
    shifted = U - mmax
    lse = jnp.log(jnp.sum(jnp.exp(shifted), axis=-1, keepdims=True))
    out_ref[...] = (shifted - lse).astype(out_ref.dtype)


# ----------------------------------------------------------------------------
# VMEM budget / tile selection (generation aware)
# ----------------------------------------------------------------------------
_MAX_BATCH_TILE = 8


def _vmem_capacity_bytes():
    try:
        info = pltpu.get_tpu_info()
        cap = getattr(info, "vmem_capacity_bytes", None)
        if cap:
            return int(cap)
    except Exception:
        pass
    return 64 * 1024 * 1024  # conservative fallback: assume v7x


def _divisors_desc(n):
    return [d for d in range(n, 0, -1) if n % d == 0]


def _step_bytes(bt, tq, kp, d, in_bytes, out_bytes, mask_bytes, c_bytes):
    q_blk = bt * tq * d * in_bytes
    k_blk = bt * kp * d * in_bytes
    w_blk = 2 * d * d * in_bytes
    o_blk = bt * tq * kp * out_bytes
    m_blk = bt * tq * kp * mask_bytes
    scratch = bt * kp * d * c_bytes
    transient = bt * tq * kp * 4 + bt * tq * d * 4  # f32 scores + f32 Q
    # BlockSpec-managed inputs/outputs are double buffered; scratch is not.
    return 2 * (q_blk + k_blk + w_blk + o_blk + m_blk) + scratch + transient


def _choose_tiles(b, n_query, kp, d, budget, in_bytes, out_bytes, mask_bytes,
                  c_bytes, tq_align):
    tq_cands = [t for t in _divisors_desc(n_query)
                if t == n_query or t % tq_align == 0] or [n_query]
    bt_all = [x for x in _divisors_desc(b) if x <= _MAX_BATCH_TILE] or [1]
    # Prefer >= 2 grid points on the batch ("parallel") axis so both v7x
    # TensorCores get work; fall back to larger batch tiles if needed.
    bt_pref = [x for x in bt_all if b // x >= 2] or bt_all
    for bt_cands in (bt_pref, bt_all):
        for bt in bt_cands:
            for tq in tq_cands:
                if _step_bytes(bt, tq, kp, d, in_bytes, out_bytes,
                               mask_bytes, c_bytes) <= budget:
                    return bt, tq
    # TODO(synk): very long n_key needs a key-dim grid axis with an online
    # (streaming) log-softmax instead of a full-width score slab.
    return 1, tq_cands[-1]


# ----------------------------------------------------------------------------
# Wrapper
# ----------------------------------------------------------------------------
def single_head_attention(q, k, w_query, w_key, mask=None, *,
                          tanh_clipping=10.0,
                          compute_dtype=jnp.bfloat16,
                          out_dtype=jnp.float32):
    """Pallas TPU implementation of SingleHeadAttention.forward.

    q: (B, n_query, D), k: (B, n_key, D), weights: (D, D),
    mask: optional (B, n_query, n_key), 1 = masked out.
    Returns (B, n_query, n_key) log-probabilities in `out_dtype`.
    """
    B, n_query, D = q.shape
    _, n_key, _ = k.shape
    norm_factor = 1.0 / math.sqrt(D)
    has_mask = mask is not None

    # Lane-dense key axis: pad n_key up to a multiple of 128 so the score
    # matmul N dim and the output stores are full-lane. Padding columns are
    # handled in-kernel (-1e9), the output is sliced back below.
    KP = ((n_key + 127) // 128) * 128
    padded = KP != n_key
    k_in = jnp.pad(k, ((0, 0), (0, KP - n_key), (0, 0))) if padded else k
    mask_in = None
    if has_mask:
        mask_in = (jnp.pad(mask, ((0, 0), (0, 0), (0, KP - n_key)))
                   if padded else mask)

    in_bytes = jnp.dtype(q.dtype).itemsize
    o_bytes = jnp.dtype(out_dtype).itemsize
    c_bytes = jnp.dtype(compute_dtype).itemsize
    m_bytes = jnp.dtype(mask_in.dtype).itemsize if has_mask else 0

    # TQ is the second-minor dim of the q / mask / output blocks: it must be a
    # sublane multiple for each dtype tiled along it (or equal the full dim).
    aligns = [32 // in_bytes, 32 // o_bytes]
    if has_mask:
        aligns.append(32 // m_bytes)
    tq_align = max(aligns)

    vmem_cap = _vmem_capacity_bytes()
    budget = vmem_cap * 3 // 4  # ~96 MiB on v5e/v6e, ~48 MiB on v7x

    BT, TQ = _choose_tiles(B, n_query, KP, D, budget, in_bytes, o_bytes,
                           m_bytes, c_bytes, tq_align)
    grid = (B // BT, n_query // TQ)

    in_specs = [
        pl.BlockSpec((BT, TQ, D), lambda bi, qi: (bi, qi, 0)),    # q tile
        pl.BlockSpec((BT, KP, D), lambda bi, qi: (bi, 0, 0)),     # k (batch tile)
        pl.BlockSpec((D, D), lambda bi, qi: (0, 0)),              # w_query
        pl.BlockSpec((D, D), lambda bi, qi: (0, 0)),              # w_key
    ]
    args = [q, k_in, w_query, w_key]
    if has_mask:
        in_specs.append(pl.BlockSpec((BT, TQ, KP), lambda bi, qi: (bi, qi, 0)))
        args.append(mask_in)

    kernel = functools.partial(
        _attention_kernel,
        norm_factor=norm_factor,
        tanh_clipping=float(tanh_clipping),
        has_mask=has_mask,
        n_key=n_key,
        compute_dtype=compute_dtype)

    step_bytes = _step_bytes(BT, TQ, KP, D, in_bytes, o_bytes, m_bytes, c_bytes)
    vmem_limit = int(min(max(step_bytes * 5 // 4, 32 * 1024 * 1024),
                         vmem_cap - 8 * 1024 * 1024))

    flops = 2 * B * (n_query + KP) * D * D + 2 * B * n_query * KP * D
    transcendentals = 2 * B * n_query * KP
    bytes_accessed = (q.size * in_bytes + k_in.size * in_bytes
                      + 2 * D * D * in_bytes
                      + (mask_in.size * m_bytes if has_mask else 0)
                      + B * n_query * KP * o_bytes)

    out = pl.pallas_call(
        kernel,
        out_shape=jax.ShapeDtypeStruct((B, n_query, KP), out_dtype),
        grid_spec=pltpu.PrefetchScalarGridSpec(
            num_scalar_prefetch=0,
            grid=grid,
            in_specs=in_specs,
            out_specs=pl.BlockSpec((BT, TQ, KP), lambda bi, qi: (bi, qi, 0)),
            scratch_shapes=[pltpu.VMEM((BT, KP, D), compute_dtype)],
        ),
        compiler_params=pltpu.CompilerParams(
            # Batch axis "parallel" (megacore); q axis MUST stay "arbitrary"
            # (innermost, sequential) for the kproj scratch reuse.
            dimension_semantics=("parallel", "arbitrary"),
            vmem_limit_bytes=vmem_limit),
        cost_estimate=pl.CostEstimate(flops=int(flops),
                                      transcendentals=int(transcendentals),
                                      bytes_accessed=int(bytes_accessed)),
    )(*args)

    return out[..., :n_key] if padded else out


# ----------------------------------------------------------------------------
# Reference & test harness
# ----------------------------------------------------------------------------
def _xavier_uniform(key, shape):
    fan_in, fan_out = shape
    bound = math.sqrt(6.0 / (fan_in + fan_out))
    return jax.random.uniform(key, shape, dtype=jnp.float32,
                              minval=-bound, maxval=bound)


def _reference(q, k, w_query, w_key, mask=None, tanh_clipping=10.0,
               compute_dtype=jnp.bfloat16):
    # Mirrors the kernel's dtype pipeline (bf16 matmul inputs, f32 accumulation)
    # so the comparison tolerance stays tight.
    D = q.shape[-1]
    norm = 1.0 / math.sqrt(D)
    qc, kc = q.astype(compute_dtype), k.astype(compute_dtype)
    wq, wk = w_query.astype(compute_dtype), w_key.astype(compute_dtype)
    Q = jnp.einsum("bqd,de->bqe", qc, wq, preferred_element_type=jnp.float32)
    K = jnp.einsum("bkd,de->bke", kc, wk, preferred_element_type=jnp.float32)
    Qs = (Q * norm).astype(compute_dtype)
    Kc = K.astype(compute_dtype)
    U = jnp.einsum("bqd,bkd->bqk", Qs, Kc, preferred_element_type=jnp.float32)
    U = tanh_clipping * jnp.tanh(U)
    if mask is not None:
        U = jnp.where(mask == 1, -100000000.0, U)
    return jax.nn.log_softmax(U, axis=-1)


if __name__ == "__main__":
    B, n_query, n_key, D = 2, 8, 16, 32

    key = jax.random.PRNGKey(0)
    kq, kk, kwq, kwk, kmask = jax.random.split(key, 5)

    q = jax.random.normal(kq, (B, n_query, D), dtype=jnp.float32)
    k = jax.random.normal(kk, (B, n_key, D), dtype=jnp.float32)
    w_query = _xavier_uniform(kwq, (D, D))
    w_key = _xavier_uniform(kwk, (D, D))
    mask = (jax.random.uniform(kmask, (B, n_query, n_key)) < 0.2).astype(jnp.int32)

    # Masked and unmasked variants (the latter compiles without a mask input).
    out_m = jax.block_until_ready(single_head_attention(q, k, w_query, w_key, mask))
    out_u = jax.block_until_ready(single_head_attention(q, k, w_query, w_key, None))

    ref_m = _reference(q, k, w_query, w_key, mask)
    ref_u = _reference(q, k, w_query, w_key, None)

    assert out_m.shape == (B, n_query, n_key)
    assert out_u.shape == (B, n_query, n_key)
    assert jnp.allclose(out_m, ref_m, atol=2e-3, rtol=2e-3), "masked mismatch"
    assert jnp.allclose(out_u, ref_u, atol=2e-3, rtol=2e-3), "unmasked mismatch"

    print("KERNEL_OK")
</pallas_src>

<mosaic_0001>
module attributes {stable_mosaic.version = 11 : i64} {
  func.func @_attention_kernel(%arg0: i32, %arg1: i32, %arg2: memref<1x8x32xf32, #tpu.memory_space<vmem>>, %arg3: memref<1x128x32xf32, #tpu.memory_space<vmem>>, %arg4: memref<32x32xf32, #tpu.memory_space<vmem>>, %arg5: memref<32x32xf32, #tpu.memory_space<vmem>>, %arg6: memref<1x8x128xi32, #tpu.memory_space<vmem>>, %arg7: memref<1x8x128xf32, #tpu.memory_space<vmem>>, %arg8: memref<1x128x32xbf16, #tpu.memory_space<vmem>>) attributes {dimension_semantics = [#tpu.dimension_semantics<parallel>, #tpu.dimension_semantics<arbitrary>], iteration_bounds = array<i64: 2, 1>, scalar_prefetch = 0 : i64, scratch_operands = 1 : i64, tpu.core_type = #tpu.core_type<tc>, window_params = [{transform_indices = @transform_0, window_bounds = array<i64: 1, 8, 32>}, {transform_indices = @transform_1, window_bounds = array<i64: 1, 128, 32>}, {pipeline_mode = #tpu.pipeline_mode<synchronous>, transform_indices = @transform_2, window_bounds = array<i64: 32, 32>}, {pipeline_mode = #tpu.pipeline_mode<synchronous>, transform_indices = @transform_3, window_bounds = array<i64: 32, 32>}, {transform_indices = @transform_4, window_bounds = array<i64: 1, 8, 128>}, {transform_indices = @transform_5, window_bounds = array<i64: 1, 8, 128>}]} {
    %c0_i32 = arith.constant 0 : i32
    %0 = arith.cmpi eq, %arg1, %c0_i32 : i32
    %1 = arith.extui %0 : i1 to i32
    %c0_i32_0 = arith.constant 0 : i32
    %2 = arith.cmpi ne, %1, %c0_i32_0 : i32
    scf.if %2 {
      %c0_21 = arith.constant 0 : index
      %c0_22 = arith.constant 0 : index
      %39 = vector.load %arg5[%c0_21, %c0_22] : memref<32x32xf32, #tpu.memory_space<vmem>>, vector<32x32xf32>
      %40 = arith.truncf %39 : vector<32x32xf32> to vector<32x32xbf16>
      %c0_23 = arith.constant 0 : index
      %c0_24 = arith.constant 0 : index
      %c0_25 = arith.constant 0 : index
      %41 = vector.load %arg3[%c0_23, %c0_24, %c0_25] : memref<1x128x32xf32, #tpu.memory_space<vmem>>, vector<1x128x32xf32>
      %42 = arith.truncf %41 : vector<1x128x32xf32> to vector<1x128x32xbf16>
      %43 = vector.shape_cast %42 : vector<1x128x32xbf16> to vector<128x32xbf16>
      %cst_26 = arith.constant dense<0.000000e+00> : vector<128x32xf32>
      %44 = tpu.matmul %43, %40, %cst_26 {dimension_numbers = #tpu.dot_dimension_numbers<[1], [0], [0], [1], [0, 0, 1, 1], [], []>} : vector<128x32xbf16>, vector<32x32xbf16>, vector<128x32xf32> -> vector<128x32xf32>
      %45 = vector.shape_cast %44 : vector<128x32xf32> to vector<1x128x32xf32>
      %46 = arith.truncf %45 : vector<1x128x32xf32> to vector<1x128x32xbf16>
      %c0_27 = arith.constant 0 : index
      %c0_28 = arith.constant 0 : index
      %c0_29 = arith.constant 0 : index
      %47 = vector.load %arg8[%c0_27, %c0_28, %c0_29] : memref<1x128x32xbf16, #tpu.memory_space<vmem>>, vector<1x128x32xbf16>
      tpu.vector_store %arg8[%c0_27, %c0_28, %c0_29], %46 {strides = array<i32>} : memref<1x128x32xbf16, #tpu.memory_space<vmem>>, vector<1x128x32xbf16>,
    } else {
    }
    %c0 = arith.constant 0 : index
    %c0_1 = arith.constant 0 : index
    %3 = vector.load %arg4[%c0, %c0_1] : memref<32x32xf32, #tpu.memory_space<vmem>>, vector<32x32xf32>
    %4 = arith.truncf %3 : vector<32x32xf32> to vector<32x32xbf16>
    %c0_2 = arith.constant 0 : index
    %c0_3 = arith.constant 0 : index
    %c0_4 = arith.constant 0 : index
    %5 = vector.load %arg2[%c0_2, %c0_3, %c0_4] : memref<1x8x32xf32, #tpu.memory_space<vmem>>, vector<1x8x32xf32>
    %6 = arith.truncf %5 : vector<1x8x32xf32> to vector<1x8x32xbf16>
    %7 = vector.shape_cast %6 : vector<1x8x32xbf16> to vector<8x32xbf16>
    %cst = arith.constant dense<0.000000e+00> : vector<8x32xf32>
    %8 = tpu.matmul %7, %4, %cst {dimension_numbers = #tpu.dot_dimension_numbers<[1], [0], [0], [1], [0, 0, 1, 1], [], []>} : vector<8x32xbf16>, vector<32x32xbf16>, vector<8x32xf32> -> vector<8x32xf32>
    %cst_5 = arith.constant 0.176776692 : f32
    %9 = vector.broadcast %cst_5 : f32 to vector<8x32xf32>
    %10 = arith.mulf %8, %9 : vector<8x32xf32>
    %11 = arith.truncf %10 : vector<8x32xf32> to vector<8x32xbf16>
    %12 = vector.shape_cast %11 : vector<8x32xbf16> to vector<1x8x32xbf16>
    %c0_6 = arith.constant 0 : index
    %c0_7 = arith.constant 0 : index
    %c0_8 = arith.constant 0 : index
    %13 = vector.load %arg8[%c0_6, %c0_7, %c0_8] : memref<1x128x32xbf16, #tpu.memory_space<vmem>>, vector<1x128x32xbf16>
    %cst_9 = arith.constant dense<0.000000e+00> : vector<1x8x128xf32>
    %14 = tpu.matmul %12, %13, %cst_9 {dimension_numbers = #tpu.dot_dimension_numbers<[2], [2], [1], [1], [0, 0, 0, 1, 1, 1], [0], [0]>} : vector<1x8x32xbf16>, vector<1x128x32xbf16>, vector<1x8x128xf32> -> vector<1x8x128xf32>
    %15 = math.tanh %14 : vector<1x8x128xf32>
    %cst_10 = arith.constant 1.000000e+01 : f32
    %16 = vector.broadcast %cst_10 : f32 to vector<1x8x128xf32>
    %17 = arith.mulf %16, %15 : vector<1x8x128xf32>
    %c0_11 = arith.constant 0 : index
    %c0_12 = arith.constant 0 : index
    %c0_13 = arith.constant 0 : index
    %18 = vector.load %arg6[%c0_11, %c0_12, %c0_13] : memref<1x8x128xi32, #tpu.memory_space<vmem>>, vector<1x8x128xi32>
    %c1_i32 = arith.constant 1 : i32
    %19 = vector.broadcast %c1_i32 : i32 to vector<1x8x128xi32>
    %20 = arith.cmpi eq, %18, %19 : vector<1x8x128xi32>
    %cst_14 = arith.constant -1.000000e+08 : f32
    %21 = vector.broadcast %cst_14 : f32 to vector<1x8x128xf32>
    %22 = arith.select %20, %21, %17 : vector<1x8x128xi1>, vector<1x8x128xf32>
    %23 = tpu.iota {dimensions = array<i32: 2>} : vector<1x8x128xi32>
    %c16_i32 = arith.constant 16 : i32
    %24 = vector.broadcast %c16_i32 : i32 to vector<1x8x128xi32>
    %25 = arith.cmpi sge, %23, %24 : vector<1x8x128xi32>
    %cst_15 = arith.constant -1.000000e+09 : f32
    %26 = vector.broadcast %cst_15 : f32 to vector<1x8x128xf32>
    %27 = arith.select %25, %26, %22 : vector<1x8x128xi1>, vector<1x8x128xf32>
    %cst_16 = arith.constant dense<0xFF800000> : vector<1x8xf32>
    %28 = vector.multi_reduction <maximumf>, %27, %cst_16 [2] : vector<1x8x128xf32> to vector<1x8xf32>
    %29 = vector.shape_cast %28 : vector<1x8xf32> to vector<1x8x1xf32>
    %30 = vector.broadcast %29 : vector<1x8x1xf32> to vector<1x8x128xf32>
    %31 = arith.subf %27, %30 : vector<1x8x128xf32>
    %32 = math.exp %31 : vector<1x8x128xf32>
    %cst_17 = arith.constant dense<0.000000e+00> : vector<1x8xf32>
    %33 = vector.multi_reduction <add>, %32, %cst_17 [2] : vector<1x8x128xf32> to vector<1x8xf32>
    %34 = vector.shape_cast %33 : vector<1x8xf32> to vector<1x8x1xf32>
    %35 = math.log %34 : vector<1x8x1xf32>
    %36 = vector.broadcast %35 : vector<1x8x1xf32> to vector<1x8x128xf32>
    %37 = arith.subf %31, %36 : vector<1x8x128xf32>
    %c0_18 = arith.constant 0 : index
    %c0_19 = arith.constant 0 : index
    %c0_20 = arith.constant 0 : index
    %38 = vector.load %arg7[%c0_18, %c0_19, %c0_20] : memref<1x8x128xf32, #tpu.memory_space<vmem>>, vector<1x8x128xf32>
    tpu.vector_store %arg7[%c0_18, %c0_19, %c0_20], %37 {strides = array<i32>} : memref<1x8x128xf32, #tpu.memory_space<vmem>>, vector<1x8x128xf32>,
    return
  }
  func.func @transform_0(%arg0: i32, %arg1: i32) -> (i32, i32, i32) {
    %c0_i32 = arith.constant 0 : i32
    %c0_i32_0 = arith.constant 0 : i32
    return %arg0, %arg1, %c0_i32 : i32, i32, i32
  }
  func.func @transform_1(%arg0: i32, %arg1: i32) -> (i32, i32, i32) {
    %c0_i32 = arith.constant 0 : i32
    %c0_i32_0 = arith.constant 0 : i32
    %c0_i32_1 = arith.constant 0 : i32
    return %arg0, %c0_i32, %c0_i32_0 : i32, i32, i32
  }
  func.func @transform_2(%arg0: i32, %arg1: i32) -> (i32, i32) {
    %c0_i32 = arith.constant 0 : i32
    %c0_i32_0 = arith.constant 0 : i32
    %c0_i32_1 = arith.constant 0 : i32
    return %c0_i32, %c0_i32_0 : i32, i32
  }
  func.func @transform_3(%arg0: i32, %arg1: i32) -> (i32, i32) {
    %c0_i32 = arith.constant 0 : i32
    %c0_i32_0 = arith.constant 0 : i32
    %c0_i32_1 = arith.constant 0 : i32
    return %c0_i32, %c0_i32_0 : i32, i32
  }
  func.func @transform_4(%arg0: i32, %arg1: i32) -> (i32, i32, i32) {
    %c0_i32 = arith.constant 0 : i32
    %c0_i32_0 = arith.constant 0 : i32
    return %arg0, %arg1, %c0_i32 : i32, i32, i32
  }
  func.func @transform_5(%arg0: i32, %arg1: i32) -> (i32, i32, i32) {
    %c0_i32 = arith.constant 0 : i32
    %c0_i32_0 = arith.constant 0 : i32
    return %arg0, %arg1, %c0_i32 : i32, i32, i32
  }
}

</mosaic_0001>

<llo_original>
// kernel: tpu_custom_call.1
$region0: #{tpu_custom_call.1}
  #allocation0 [shape = 'u32[]', space=smem, size = 0x4, offset = 0x4, fixed_abs, tag = 'smem constant byte address 0x4 - core index']
  #allocation1 [shape = 'u32[144,128]{1,0:T(1,128)}', space=vmem, size = 0x12000, scoped, tag = 'internal scratch']
  #allocation2 [shape = 'bf16[1,128,32]{2,1,0:T(16,128)(2,1)}', space=vmem, size = 0x8000, scoped, tag = 'scratch operand']
  %s0 = inlined_call_operand.vmem [shape: f32[2,8,32], index: 0, kind: input, shape index: {}]
  %s1 = inlined_call_operand.vmem [shape: f32[2,128,32], index: 1, kind: input, shape index: {}]
  %s2 = inlined_call_operand.vmem [shape: f32[32,32], index: 2, kind: input, shape index: {}]
  %s3 = inlined_call_operand.vmem [shape: f32[32,32], index: 3, kind: input, shape index: {}]
  %s4 = inlined_call_operand.vmem [shape: s32[2,8,128], index: 4, kind: input, shape index: {}]
  %s5 = inlined_call_operand.hbm [shape: f32[2,8,128], index: 5, kind: output, shape index: {}]
  %s6 = sld [smem:[#allocation0]]
  $region57: #{tpu_custom_call.1} parent=0
    _
  %s8 = ssub.s32 1, %s6
  %s9 = scalar_select 0, %s8, %s6
  $region1: #{tpu_custom_call.1} parent=0
    #allocation3 [shape = 'u8[8192]{0}', space=vmem, size = 0x2000, scoped, tag = 'output window, operand 0']
    #allocation4 [shape = 's32[2]{0}', space=sflag, size = 0x8, scoped, tag = 'scoped memory for tpu_custom_call.1']
    %10 = vsyncpa [#allocation4], 0
    %s11 = scalar_lea.sflag [#allocation4], 1
    %12 = vsyncpa %s11, 0
    loop: start=0, step=1, limit=4
    $region2: #{tpu_custom_call.1} parent=1 // loop_pre_header
      _
    $region3: #{tpu_custom_call.1} parent=1 // loop_header
      %s14 = sphi 0, %s18
      %p15 = scmp.ge.s32.totalorder %s14, 4
      %s21 = sphi 0, %s33
      %s22 = sphi 0, %s29
      %s23 = sphi 0, %s21
      %s24 = sphi 0, %s22
      %s25 = sphi 0, %s23
      %s26 = sphi 0, %s24
      %s38 = sphi 0, %s40
      %s41 = sphi 0, %s38
      %s42 = sphi 0, %s41
      %s58 = sphi 0, %s42
      %s64 = sphi 0, %s66
      %s67 = sphi 0, %s64
      %s68 = sphi 0, %s67
      %s84 = sphi 0, %s68
      %s88 = sphi 0, %s88
      %s90 = sphi 0, %s88
      %s91 = sphi 0, %s90
      %s105 = sphi 0, %s91
      %s109 = sphi 0, %s109
      %s111 = sphi 0, %s109
      %s112 = sphi 0, %s111
      %s126 = sphi 0, %s112
      %s134 = sphi 0, %s136
      %s137 = sphi 0, %s134
      %s138 = sphi 0, %s137
      %s154 = sphi 0, %s138
      %s162 = sphi 0, %s164
      %s165 = sphi 0, %s162
      %s166 = sphi 0, %s165
      %s182 = sphi 0, %s166
    $region4: #{tpu_custom_call.1} parent=1 // loop_header_branch
      %17 = sbr.rel (%p15) target = $region8
    $region5: #{tpu_custom_call.1} parent=1 // loop_body
      %s19 = ssub.s32 %s14, 1
      %s20 = ssub.s32 %s14, 2
      %s27 = sadd.s32 1, %s22
      %p28 = scmp.ge.s32.totalorder %s27, 1
      %s29 = scalar_select %p28, 0, %s27
      %s30 = sadd.s32 1, %s21
      %s31 = scalar_select %p28, %s30, %s21
      %p32 = scmp.ge.s32.totalorder %s31, 2
      %s33 = scalar_select %p32, 0, %s31
      %s34 = ssub.s32 %s21, %s33
      %s35 = ssub.s32 %s22, %s29
      %s36 = sor.u32 %s34, %s35
      %p37 = scmp.eq.s32.totalorder %s36, 0
      %s39 = sadd.s32 %s38, 1
      %s40 = scalar_select %p37, %s38, %s39
      %p43 = pneg %p37
      %p44 = scmp.eq.s32.totalorder %s14, 1
      %p45 = por %p43, %p44
      %p46 = scmp.ne.s32.totalorder %s38, %s41
      %p47 = scmp.eq.s32.totalorder %s14, 0
      %p48 = por %p46, %p47
      %p49 = scmp.ne.s32.totalorder %s38, %s41
      %p50 = scmp.eq.s32.totalorder %s19, 1
      %p51 = por %p49, %p50
      %p52 = scmp.ne.s32.totalorder %s41, %s42
      %p53 = scmp.eq.s32.totalorder %s19, 0
      %p54 = por %p52, %p53
      %p55 = scmp.ne.s32.totalorder %s41, %s42
      %p56 = scmp.eq.s32.totalorder %s20, 1
      %p57 = por %p55, %p56
      %p59 = scmp.ne.s32.totalorder %s42, %s58
      %p60 = scmp.eq.s32.totalorder %s20, 0
      %p61 = por %p59, %p60
      %s62 = ssub.s32 %s21, %s33
      %p63 = scmp.eq.s32.totalorder %s62, 0
      %s65 = sadd.s32 %s64, 1
      %s66 = scalar_select %p63, %s64, %s65
      %p69 = pneg %p63
      %p70 = scmp.eq.s32.totalorder %s14, 1
      %p71 = por %p69, %p70
      %p72 = scmp.ne.s32.totalorder %s64, %s67
      %p73 = scmp.eq.s32.totalorder %s14, 0
      %p74 = por %p72, %p73
      %p75 = scmp.ne.s32.totalorder %s64, %s67
      %p76 = scmp.eq.s32.totalorder %s19, 1
      %p77 = por %p75, %p76
      %p78 = scmp.ne.s32.totalorder %s67, %s68
      %p79 = scmp.eq.s32.totalorder %s19, 0
      %p80 = por %p78, %p79
      %p81 = scmp.ne.s32.totalorder %s67, %s68
      %p82 = scmp.eq.s32.totalorder %s20, 1
      %p83 = por %p81, %p82
      %p85 = scmp.ne.s32.totalorder %s68, %s84
      %p86 = scmp.eq.s32.totalorder %s20, 0
      %p87 = por %p85, %p86
      %s89 = sadd.s32 %s88, 1
      %p92 = scmp.eq.s32.totalorder %s14, 1
      %p93 = scmp.ne.s32.totalorder %s88, %s90
      %p94 = scmp.eq.s32.totalorder %s14, 0
      %p95 = por %p93, %p94
      %p96 = scmp.ne.s32.totalorder %s88, %s90
      %p97 = scmp.eq.s32.totalorder %s19, 1
      %p98 = por %p96, %p97
      %p99 = scmp.ne.s32.totalorder %s90, %s91
      %p100 = scmp.eq.s32.totalorder %s19, 0
      %p101 = por %p99, %p100
      %p102 = scmp.ne.s32.totalorder %s90, %s91
      %p103 = scmp.eq.s32.totalorder %s20, 1
      %p104 = por %p102, %p103
      %p106 = scmp.ne.s32.totalorder %s91, %s105
      %p107 = scmp.eq.s32.totalorder %s20, 0
      %p108 = por %p106, %p107
      %s110 = sadd.s32 %s109, 1
      %p113 = scmp.eq.s32.totalorder %s14, 1
      %p114 = scmp.ne.s32.totalorder %s109, %s111
      %p115 = scmp.eq.s32.totalorder %s14, 0
      %p116 = por %p114, %p115
      %p117 = scmp.ne.s32.totalorder %s109, %s111
      %p118 = scmp.eq.s32.totalorder %s19, 1
      %p119 = por %p117, %p118
      %p120 = scmp.ne.s32.totalorder %s111, %s112
      %p121 = scmp.eq.s32.totalorder %s19, 0
      %p122 = por %p120, %p121
      %p123 = scmp.ne.s32.totalorder %s111, %s112
      %p124 = scmp.eq.s32.totalorder %s20, 1
      %p125 = por %p123, %p124
      %p127 = scmp.ne.s32.totalorder %s112, %s126
      %p128 = scmp.eq.s32.totalorder %s20, 0
      %p129 = por %p127, %p128
      %s130 = ssub.s32 %s21, %s33
      %s131 = ssub.s32 %s22, %s29
      %s132 = sor.u32 %s130, %s131
      %p133 = scmp.eq.s32.totalorder %s132, 0
      %s135 = sadd.s32 %s134, 1
      %s136 = scalar_select %p133, %s134, %s135
      %p139 = pneg %p133
      %p140 = scmp.eq.s32.totalorder %s14, 1
      %p141 = por %p139, %p140
      %p142 = scmp.ne.s32.totalorder %s134, %s137
      %p143 = scmp.eq.s32.totalorder %s14, 0
      %p144 = por %p142, %p143
      %p145 = scmp.ne.s32.totalorder %s134, %s137
      %p146 = scmp.eq.s32.totalorder %s19, 1
      %p147 = por %p145, %p146
      %p148 = scmp.ne.s32.totalorder %s137, %s138
      %p149 = scmp.eq.s32.totalorder %s19, 0
      %p150 = por %p148, %p149
      %p151 = scmp.ne.s32.totalorder %s137, %s138
      %p152 = scmp.eq.s32.totalorder %s20, 1
      %p153 = por %p151, %p152
      %p155 = scmp.ne.s32.totalorder %s138, %s154
      %p156 = scmp.eq.s32.totalorder %s20, 0
      %p157 = por %p155, %p156
      %s158 = ssub.s32 %s21, %s33
      %s159 = ssub.s32 %s22, %s29
      %s160 = sor.u32 %s158, %s159
      %p161 = scmp.eq.s32.totalorder %s160, 0
      %s163 = sadd.s32 %s162, 1
      %s164 = scalar_select %p161, %s162, %s163
      %p167 = pneg %p161
      %p168 = scmp.eq.s32.totalorder %s14, 1
      %p169 = por %p167, %p168
      %p170 = scmp.ne.s32.totalorder %s162, %s165
      %p171 = scmp.eq.s32.totalorder %s14, 0
      %p172 = por %p170, %p171
      %p173 = scmp.ne.s32.totalorder %s162, %s165
      %p174 = scmp.eq.s32.totalorder %s19, 1
      %p175 = por %p173, %p174
      %p176 = scmp.ne.s32.totalorder %s165, %s166
      %p177 = scmp.eq.s32.totalorder %s19, 0
      %p178 = por %p176, %p177
      %p179 = scmp.ne.s32.totalorder %s165, %s166
      %p180 = scmp.eq.s32.totalorder %s20, 1
      %p181 = por %p179, %p180
      %p183 = scmp.ne.s32.totalorder %s166, %s182
      %p184 = scmp.eq.s32.totalorder %s20, 0
      %p185 = por %p183, %p184
      %p186 = scmp.le.s32.totalorder 1, %s14
      %p187 = scmp.lt.s32.totalorder %s14, 3
      %p188 = pnand %p186, %p187
      %p189 = pneg %p188
      // Predicated region
      $region9: #{tpu_custom_call.1} parent=5 // pred_check
        _
      $region10: #{tpu_custom_call.1} parent=5 // pred_check_branch
        %191 = sbr.rel (%p188) target = $region12
      $region11: #{tpu_custom_call.1} parent=5 // pred_region
        %s192 = ssub.s32 %s14, 1
        // Predicated region
        $region13: #{tpu_custom_call.1} parent=11 // pred_check
          %p193 = pneg %p101
        $region14: #{tpu_custom_call.1} parent=11 // pred_check_branch
          %195 = sbr.rel (%p193) target = $region16
        $region15: #{tpu_custom_call.1} parent=11 // pred_region
          _
        $region16: #{tpu_custom_call.1} parent=11 // pred_fallthru
          _
        // Predicated region
        $region17: #{tpu_custom_call.1} parent=11 // pred_check
          %p196 = pneg %p122
        $region18: #{tpu_custom_call.1} parent=11 // pred_check_branch
          %198 = sbr.rel (%p196) target = $region20
        $region19: #{tpu_custom_call.1} parent=11 // pred_region
          _
        $region20: #{tpu_custom_call.1} parent=11 // pred_fallthru
          _
      $region12: #{tpu_custom_call.1} parent=5 // pred_fallthru
        _
      %p199 = scmp.lt.s32.totalorder %s14, 2
      // Predicated region
      $region21: #{tpu_custom_call.1} parent=5 // pred_check
        %p200 = pneg %p199
      $region22: #{tpu_custom_call.1} parent=5 // pred_check_branch
        %202 = sbr.rel (%p200) target = $region24
      $region23: #{tpu_custom_call.1} parent=5 // pred_region
        // Predicated region
        $region25: #{tpu_custom_call.1} parent=23 // pred_check
          %p203 = pneg %p48
        $region26: #{tpu_custom_call.1} parent=23 // pred_check_branch
          %205 = sbr.rel (%p203) target = $region28
        $region27: #{tpu_custom_call.1} parent=23 // pred_region
          %p206 = scmp.lt.s32.totalorder %s21, 1
          %s207 = scalar_select %p206, %s21, 1
          %p208 = scmp.lt.s32.totalorder %s22, 0
          %s209 = scalar_select %p208, %s22, 0
          %s210 = sadd.s32 %s209, %s207
          %s211 = smul.addr %s210, 8
          %s212 = scalar_lea.vmem %s0, %s211
        $region28: #{tpu_custom_call.1} parent=23 // pred_fallthru
          _
        // Predicated region
        $region29: #{tpu_custom_call.1} parent=23 // pred_check
          %p213 = pneg %p74
        $region30: #{tpu_custom_call.1} parent=23 // pred_check_branch
          %215 = sbr.rel (%p213) target = $region32
        $region31: #{tpu_custom_call.1} parent=23 // pred_region
          %p216 = scmp.lt.s32.totalorder %s21, 1
          %s217 = scalar_select %p216, %s21, 1
          %s218 = smul.addr %s217, 16
          %s219 = smul.addr %s218, 8
          %s220 = scalar_lea.vmem %s1, %s219
        $region32: #{tpu_custom_call.1} parent=23 // pred_fallthru
          _
        // Predicated region
        $region33: #{tpu_custom_call.1} parent=23 // pred_check
          %p221 = pneg %p144
        $region34: #{tpu_custom_call.1} parent=23 // pred_check_branch
          %223 = sbr.rel (%p221) target = $region36
        $region35: #{tpu_custom_call.1} parent=23 // pred_region
          %p224 = scmp.lt.s32.totalorder %s21, 1
          %s225 = scalar_select %p224, %s21, 1
          %p226 = scmp.lt.s32.totalorder %s22, 0
          %s227 = scalar_select %p226, %s22, 0
          %s228 = sadd.s32 %s227, %s225
          %s229 = smul.addr %s228, 8
          %s230 = scalar_lea.vmem %s4, %s229
        $region36: #{tpu_custom_call.1} parent=23 // pred_fallthru
          _
      $region24: #{tpu_custom_call.1} parent=5 // pred_fallthru
        _
      %p231 = scmp.le.s32.totalorder 1, %s14
      %p232 = scmp.lt.s32.totalorder %s14, 3
      %p233 = pnand %p231, %p232
      %p234 = pneg %p233
      // Predicated region
      $region37: #{tpu_custom_call.1} parent=5 // pred_check
        _
      $region38: #{tpu_custom_call.1} parent=5 // pred_check_branch
        %236 = sbr.rel (%p233) target = $region40
      $region39: #{tpu_custom_call.1} parent=5 // pred_region
        %s237 = ssub.s32 %s14, 1
        %p238 = scmp.lt.s32.totalorder %s23, 1
        %s239 = scalar_select %p238, %s23, 1
        %p240 = scmp.lt.s32.totalorder %s24, 0
        %s241 = scalar_select %p240, %s24, 0
        %s242 = sadd.s32 %s241, %s239
        %s243 = smul.addr %s242, 8
        %s244 = scalar_lea.vmem %s0, %s243
        %p245 = pneg %p54
        %p246 = pneg %p51
        %p247 = scmp.lt.s32.totalorder %s23, 1
        %s248 = scalar_select %p247, %s23, 1
        %s249 = smul.addr %s248, 16
        %s250 = smul.addr %s249, 8
        %s251 = scalar_lea.vmem %s1, %s250
        %p252 = pneg %p80
        %p253 = pneg %p77
        %p254 = pneg %p101
        %p255 = pneg %p98
        %p256 = pneg %p122
        %p257 = pneg %p119
        %p258 = scmp.lt.s32.totalorder %s23, 1
        %s259 = scalar_select %p258, %s23, 1
        %p260 = scmp.lt.s32.totalorder %s24, 0
        %s261 = scalar_select %p260, %s24, 0
        %s262 = sadd.s32 %s261, %s259
        %s263 = smul.addr %s262, 8
        %s264 = scalar_lea.vmem %s4, %s263
        %p265 = pneg %p150
        %p266 = pneg %p147
        %p267 = pneg %p178
        %p268 = pneg %p175
        %s269 = sand.u32 %s165, 1
        %s270 = scalar_lea.sflag [#allocation4], %s269
        %s271 = sand.u32 %s165, 1
        %s272 = smul.addr %s271, 8
        %s273 = scalar_lea.vmem [#allocation3], %s272
        %p274 = scmp.lt.s32.totalorder %s23, 1
        %s275 = scalar_select %p274, %s23, 1
        %p276 = scmp.lt.s32.totalorder %s24, 0
        %s277 = scalar_select %p276, %s24, 0
        %s278 = sadd.s32 %s277, %s275
        %s279 = smul.addr %s278, 8
        %s280 = scalar_lea.vmem %s0, %s279
        %p281 = scmp.lt.s32.totalorder %s23, 1
        %s282 = scalar_select %p281, %s23, 1
        %s283 = smul.addr %s282, 16
        %s284 = smul.addr %s283, 8
        %s285 = scalar_lea.vmem %s1, %s284
        %p286 = scmp.lt.s32.totalorder %s23, 1
        %s287 = scalar_select %p286, %s23, 1
        %p288 = scmp.lt.s32.totalorder %s24, 0
        %s289 = scalar_select %p288, %s24, 0
        %s290 = sadd.s32 %s289, %s287
        %s291 = smul.addr %s290, 8
        %s292 = scalar_lea.vmem %s4, %s291
        %p294 = scmp.eq.s32.totalorder %s24, 0
        // Predicated region
        $region41: #{tpu_custom_call.1} parent=39 // pred_check
          %p295 = pneg %p294
        $region42: #{tpu_custom_call.1} parent=39 // pred_check_branch
          %297 = sbr.rel (%p295) target = $region44
        $region43: #{tpu_custom_call.1} parent=39 // pred_region
          %v298 = vld [vmem:[%s3] sm:$0xff]
          %v299 = vld [vmem:[%s3 + $0x8] sm:$0xff]
          %v300 = vld [vmem:[%s3 + $0x10] sm:$0xff]
          %v301 = vld [vmem:[%s3 + $0x18] sm:$0xff]
          %v302 = vpack.c.bf16 %v299, %v298
          %v303 = vpack.c.bf16 %v301, %v300
          %v304 = vld [vmem:[%s285] sm:$0xff]
          %v305 = vld [vmem:[%s285 + $0x8] sm:$0xff]
          %v306 = vld [vmem:[%s285 + $0x10] sm:$0xff]
          %v307 = vld [vmem:[%s285 + $0x18] sm:$0xff]
          %v308 = vld [vmem:[%s285 + $0x20] sm:$0xff]
          %v309 = vld [vmem:[%s285 + $0x28] sm:$0xff]
          %v310 = vld [vmem:[%s285 + $0x30] sm:$0xff]
          %v311 = vld [vmem:[%s285 + $0x38] sm:$0xff]
          %v312 = vld [vmem:[%s285 + $0x40] sm:$0xff]
          %v313 = vld [vmem:[%s285 + $0x48] sm:$0xff]
          %v314 = vld [vmem:[%s285 + $0x50] sm:$0xff]
          %v315 = vld [vmem:[%s285 + $0x58] sm:$0xff]
          %v316 = vld [vmem:[%s285 + $0x60] sm:$0xff]
          %v317 = vld [vmem:[%s285 + $0x68] sm:$0xff]
          %v318 = vld [vmem:[%s285 + $0x70] sm:$0xff]
          %v319 = vld [vmem:[%s285 + $0x78] sm:$0xff]
          %v320 = vpack.c.bf16 %v305, %v304
          %v321 = vpack.c.bf16 %v307, %v306
          %v322 = vpack.c.bf16 %v309, %v308
          %v323 = vpack.c.bf16 %v311, %v310
          %v324 = vpack.c.bf16 %v313, %v312
          %v325 = vpack.c.bf16 %v315, %v314
          %v326 = vpack.c.bf16 %v317, %v316
          %v327 = vpack.c.bf16 %v319, %v318
          %vm328 = vcmask 261120
          %v330 = vsel %vm328, %v320, 0
          %v333 = vsel %vm328, %v321, 0
          %v336 = vsel %vm328, %v322, 0
          %v339 = vsel %vm328, %v323, 0
          %v342 = vsel %vm328, %v324, 0
          %v345 = vsel %vm328, %v325, 0
          %v348 = vsel %vm328, %v326, 0
          %v351 = vsel %vm328, %v327, 0
          %353 = vmatprep.subr.bf16.mxu0 0
          %354 = vmatpush1.bf16.msra.mxu0 %v302
          %355 = vmatprep.subr.bf16.mxu0 0
          %356 = vmatpush1.bf16.msra.mxu0 %v303
          %357 = vmatprep.subr.bf16.mxu0 0
          %358 = vmatpush1.bf16.msra.mxu0 0
          %359 = vmatprep.subr.bf16.mxu0 0
          %360 = vmatpush1.bf16.msra.mxu0 0
          %361 = vmatprep.subr.bf16.mxu0 0
          %362 = vmatpush1.bf16.msra.mxu0 0
          %363 = vmatprep.subr.bf16.mxu0 0
          %364 = vmatpush1.bf16.msra.mxu0 0
          %365 = vmatprep.subr.bf16.mxu0 0
          %366 = vmatpush1.bf16.msra.mxu0 0
          %367 = vmatprep.subr.bf16.mxu0 0
          %368 = vmatpush1.bf16.msra.mxu0 0
          %369 = vmatprep.subr.bf16.mxu0 0
          %370 = vmatpush1.bf16.msra.mxu0 0
          %371 = vmatprep.subr.bf16.mxu0 0
          %372 = vmatpush1.bf16.msra.mxu0 0
          %373 = vmatprep.subr.bf16.mxu0 0
          %374 = vmatpush1.bf16.msra.mxu0 0
          %375 = vmatprep.subr.bf16.mxu0 0
          %376 = vmatpush1.bf16.msra.mxu0 0
          %377 = vmatprep.subr.bf16.mxu0 0
          %378 = vmatpush1.bf16.msra.mxu0 0
          %379 = vmatprep.subr.bf16.mxu0 0
          %380 = vmatpush1.bf16.msra.mxu0 0
          %381 = vmatprep.subr.bf16.mxu0 0
          %382 = vmatpush1.bf16.msra.mxu0 0
          %383 = vmatprep.subr.bf16.mxu0 0
          %384 = vmatpush1.bf16.msra.mxu0 0
          %385 = vmatprep.mubr.bf16.mxu0 0
          %386 = vmatmul.mubr.bf16.gmra.mrb[0].mxu0 %v330
          %v387 = vpop.f32.mrb[0].mxu0
          %v388 = vadd.f32 0.0, %v387
          %v389 = vpop.f32.mrb[0].mxu0
          %v390 = vpop.f32.mrb[0].mxu0
          %v391 = vadd.f32 0.0, %v390
          %v392 = vpop.f32.mrb[0].mxu0
          %393 = vmatprep.mubr.bf16.mxu0 0
          %394 = vmatmul.mubr.bf16.gmra.mrb[0].mxu0 %v333
          %v395 = vpop.f32.mrb[0].mxu0
          %v396 = vadd.f32 0.0, %v395
          %v397 = vpop.f32.mrb[0].mxu0
          %v398 = vpop.f32.mrb[0].mxu0
          %v399 = vadd.f32 0.0, %v398
          %v400 = vpop.f32.mrb[0].mxu0
          %401 = vmatprep.mubr.bf16.mxu0 0
          %402 = vmatmul.mubr.bf16.gmra.mrb[0].mxu0 %v336
          %v403 = vpop.f32.mrb[0].mxu0
          %v404 = vadd.f32 0.0, %v403
          %v405 = vpop.f32.mrb[0].mxu0
          %v406 = vpop.f32.mrb[0].mxu0
          %v407 = vadd.f32 0.0, %v406
          %v408 = vpop.f32.mrb[0].mxu0
          %409 = vmatprep.mubr.bf16.mxu0 0
          %410 = vmatmul.mubr.bf16.gmra.mrb[0].mxu0 %v339
          %v411 = vpop.f32.mrb[0].mxu0
          %v412 = vadd.f32 0.0, %v411
          %v413 = vpop.f32.mrb[0].mxu0
          %v414 = vpop.f32.mrb[0].mxu0
          %v415 = vadd.f32 0.0, %v414
          %v416 = vpop.f32.mrb[0].mxu0
          %417 = vmatprep.mubr.bf16.mxu0 0
          %418 = vmatmul.mubr.bf16.gmra.mrb[0].mxu0 %v342
          %v419 = vpop.f32.mrb[0].mxu0
          %v420 = vadd.f32 0.0, %v419
          %v421 = vpop.f32.mrb[0].mxu0
          %v422 = vpop.f32.mrb[0].mxu0
          %v423 = vadd.f32 0.0, %v422
          %v424 = vpop.f32.mrb[0].mxu0
          %425 = vmatprep.mubr.bf16.mxu0 0
          %426 = vmatmul.mubr.bf16.gmra.mrb[0].mxu0 %v345
          %v427 = vpop.f32.mrb[0].mxu0
          %v428 = vadd.f32 0.0, %v427
          %v429 = vpop.f32.mrb[0].mxu0
          %v430 = vpop.f32.mrb[0].mxu0
          %v431 = vadd.f32 0.0, %v430
          %v432 = vpop.f32.mrb[0].mxu0
          %433 = vmatprep.mubr.bf16.mxu0 0
          %434 = vmatmul.mubr.bf16.gmra.mrb[0].mxu0 %v348
          %v435 = vpop.f32.mrb[0].mxu0
          %v436 = vadd.f32 0.0, %v435
          %v437 = vpop.f32.mrb[0].mxu0
          %v438 = vpop.f32.mrb[0].mxu0
          %v439 = vadd.f32 0.0, %v438
          %v440 = vpop.f32.mrb[0].mxu0
          %441 = vmatprep.mubr.bf16.mxu0 0
          %442 = vmatmul.mubr.bf16.gmra.mrb[0].mxu0 %v351
          %v443 = vpop.f32.mrb[0].mxu0
          %v444 = vadd.f32 0.0, %v443
          %v445 = vpop.f32.mrb[0].mxu0
          %v446 = vpop.f32.mrb[0].mxu0
          %v447 = vadd.f32 0.0, %v446
          %v448 = vpop.f32.mrb[0].mxu0
          %449 = vdwg.mxu0
          %v450 = vpack.c.bf16 %v391, %v388
          %v451 = vpack.c.bf16 %v399, %v396
          %v452 = vpack.c.bf16 %v407, %v404
          %v453 = vpack.c.bf16 %v415, %v412
          %v454 = vpack.c.bf16 %v423, %v420
          %v455 = vpack.c.bf16 %v431, %v428
          %v456 = vpack.c.bf16 %v439, %v436
          %v457 = vpack.c.bf16 %v447, %v444
          %458 = vst.msk [vmem:[#allocation2] sm:$0xff] %vm328, %v450
          %459 = vst.msk [vmem:[#allocation2 + $0x8] sm:$0xff] %vm328, %v451
          %460 = vst.msk [vmem:[#allocation2 + $0x10] sm:$0xff] %vm328, %v452
          %461 = vst.msk [vmem:[#allocation2 + $0x18] sm:$0xff] %vm328, %v453
          %462 = vst.msk [vmem:[#allocation2 + $0x20] sm:$0xff] %vm328, %v454
          %463 = vst.msk [vmem:[#allocation2 + $0x28] sm:$0xff] %vm328, %v455
          %464 = vst.msk [vmem:[#allocation2 + $0x30] sm:$0xff] %vm328, %v456
          %465 = vst.msk [vmem:[#allocation2 + $0x38] sm:$0xff] %vm328, %v457
        $region44: #{tpu_custom_call.1} parent=39 // pred_fallthru
          _
        %v466 = vld [vmem:[%s2] sm:$0xff]
        %v467 = vld [vmem:[%s2 + $0x8] sm:$0xff]
        %v468 = vld [vmem:[%s2 + $0x10] sm:$0xff]
        %v469 = vld [vmem:[%s2 + $0x18] sm:$0xff]
        %v470 = vpack.c.bf16 %v467, %v466
        %v471 = vpack.c.bf16 %v469, %v468
        %v472 = vld [vmem:[%s280] sm:$0xff]
        %v473 = vpack.c.bf16 %v472, %v472
        %vm474 = vcmask 261120
        %v476 = vsel %vm474, %v473, 0
        %478 = vmatprep.subr.bf16.mxu0 0
        %479 = vmatpush1.bf16.msra.mxu0 %v470
        %480 = vmatprep.subr.bf16.mxu0 0
        %481 = vmatpush1.bf16.msra.mxu0 %v471
        %482 = vmatprep.subr.bf16.mxu0 0
        %483 = vmatpush1.bf16.msra.mxu0 0
        %484 = vmatprep.subr.bf16.mxu0 0
        %485 = vmatpush1.bf16.msra.mxu0 0
        %486 = vmatprep.subr.bf16.mxu0 0
        %487 = vmatpush1.bf16.msra.mxu0 0
        %488 = vmatprep.subr.bf16.mxu0 0
        %489 = vmatpush1.bf16.msra.mxu0 0
        %490 = vmatprep.subr.bf16.mxu0 0
        %491 = vmatpush1.bf16.msra.mxu0 0
        %492 = vmatprep.subr.bf16.mxu0 0
        %493 = vmatpush1.bf16.msra.mxu0 0
        %494 = vmatprep.subr.bf16.mxu0 0
        %495 = vmatpush1.bf16.msra.mxu0 0
        %496 = vmatprep.subr.bf16.mxu0 0
        %497 = vmatpush1.bf16.msra.mxu0 0
        %498 = vmatprep.subr.bf16.mxu0 0
        %499 = vmatpush1.bf16.msra.mxu0 0
        %500 = vmatprep.subr.bf16.mxu0 0
        %501 = vmatpush1.bf16.msra.mxu0 0
        %502 = vmatprep.subr.bf16.mxu0 0
        %503 = vmatpush1.bf16.msra.mxu0 0
        %504 = vmatprep.subr.bf16.mxu0 0
        %505 = vmatpush1.bf16.msra.mxu0 0
        %506 = vmatprep.subr.bf16.mxu0 0
        %507 = vmatpush1.bf16.msra.mxu0 0
        %508 = vmatprep.subr.bf16.mxu0 0
        %509 = vmatpush1.bf16.msra.mxu0 0
        %510 = vmatprep.mubr.bf16.mxu0 0
        %511 = vmatmul.mubr.bf16.gmra.mrb[0].mxu0 %v476
        %v512 = vpop.f32.mrb[0].mxu0
        %v513 = vadd.f32 0.0, %v512
        %v514 = vpop.f32.mrb[0].mxu0
        %v515 = vpop.f32.mrb[0].mxu0
        %v516 = vpop.f32.mrb[0].mxu0
        %517 = vdwg.mxu0
        %v518 = vmul.f32 %v513, 0.17677669
        %v519 = vpack.c.bf16 %v518, %v518
        %v520 = vld [vmem:[#allocation2] sm:$0xff]
        %v521 = vld [vmem:[#allocation2 + $0x8] sm:$0xff]
        %v522 = vld [vmem:[#allocation2 + $0x10] sm:$0xff]
        %v523 = vld [vmem:[#allocation2 + $0x18] sm:$0xff]
        %v524 = vld [vmem:[#allocation2 + $0x20] sm:$0xff]
        %v525 = vld [vmem:[#allocation2 + $0x28] sm:$0xff]
        %v526 = vld [vmem:[#allocation2 + $0x30] sm:$0xff]
        %v527 = vld [vmem:[#allocation2 + $0x38] sm:$0xff]
        %v529 = vsel %vm474, %v519, 0
        %v532 = vsel %vm474, %v520, 0
        %v535 = vsel %vm474, %v521, 0
        %v538 = vsel %vm474, %v522, 0
        %v541 = vsel %vm474, %v523, 0
        %v544 = vsel %vm474, %v524, 0
        %v547 = vsel %vm474, %v525, 0
        %v550 = vsel %vm474, %v526, 0
        %v553 = vsel %vm474, %v527, 0
        %555 = vmatprep.subr.bf16.mxu0 0
        %556 = vmatpush1.bf16.xpose.msra.mxu0 %v532
        %557 = vmatprep.subr.bf16.mxu0 0
        %558 = vmatpush1.bf16.xpose.msra.mxu0 %v535
        %559 = vmatprep.subr.bf16.mxu0 0
        %560 = vmatpush1.bf16.xpose.msra.mxu0 %v538
        %561 = vmatprep.subr.bf16.mxu0 0
        %562 = vmatpush1.bf16.xpose.msra.mxu0 %v541
        %563 = vmatprep.subr.bf16.mxu0 0
        %564 = vmatpush1.bf16.xpose.msra.mxu0 %v544
        %565 = vmatprep.subr.bf16.mxu0 0
        %566 = vmatpush1.bf16.xpose.msra.mxu0 %v547
        %567 = vmatprep.subr.bf16.mxu0 0
        %568 = vmatpush1.bf16.xpose.msra.mxu0 %v550
        %569 = vmatprep.subr.bf16.mxu0 0
        %570 = vmatpush1.bf16.xpose.msra.mxu0 %v553
        %571 = vmatprep.subr.bf16.mxu0 0
        %572 = vmatpush1.bf16.xpose.msra.mxu0 0
        %573 = vmatprep.subr.bf16.mxu0 0
        %574 = vmatpush1.bf16.xpose.msra.mxu0 0
        %575 = vmatprep.subr.bf16.mxu0 0
        %576 = vmatpush1.bf16.xpose.msra.mxu0 0
        %577 = vmatprep.subr.bf16.mxu0 0
        %578 = vmatpush1.bf16.xpose.msra.mxu0 0
        %579 = vmatprep.subr.bf16.mxu0 0
        %580 = vmatpush1.bf16.xpose.msra.mxu0 0
        %581 = vmatprep.subr.bf16.mxu0 0
        %582 = vmatpush1.bf16.xpose.msra.mxu0 0
        %583 = vmatprep.subr.bf16.mxu0 0
        %584 = vmatpush1.bf16.xpose.msra.mxu0 0
        %585 = vmatprep.subr.bf16.mxu0 0
        %586 = vmatpush1.bf16.xpose.msra.mxu0 0
        %587 = vmatprep.mubr.bf16.mxu0 0
        %588 = vmatmul.mubr.bf16.gmra.mrb[0].mxu0 %v529
        %v589 = vpop.f32.mrb[0].mxu0
        %v590 = vadd.f32 0.0, %v589
        %v591 = vpop.f32.mrb[0].mxu0
        %v592 = vpop.f32.mrb[0].mxu0
        %v593 = vpop.f32.mrb[0].mxu0
        %594 = vdwg.mxu0
        %v595 = vtanh.pop %v590
        %v596 = vmul.f32 %v595, 10.0
        %v597 = vld [vmem:[%s292] sm:$0xff]
        %vm598 = vcmp.eq.s32.totalorder %v597, 1
        %v599 = vsel %vm598, -1e+08, %v596
        %v600 = vlaneseq
        %v601 = vand.u32 %v600, 127
        %vm602 = vcmp.ge.s32.totalorder %v601, 16
        %v603 = vsel %vm602, -1e+09, %v599
        %604 = vmax.xlane.f32.xlu0 %v603
        %v605 = vpop.xlane.xlu0 %604
        %v606 = vsub.f32 %v603, %v605
        %v607 = vmul.f32 %v606, 1.442695
        %v608 = vpow.pop %v607
        %609 = vadd.xlane.f32.xlu0 %v608
        %v610 = vpop.xlane.xlu0 %609
        %v611 = vlog2.pop %v610
        %v612 = vmul.f32 %v611, 0.6931472
        %v613 = vsub.f32 %v606, %v612
        %614 = vst [vmem:[%s273] sm:$0xff] %v613
        %s615 = sand.u32 %s165, 1
        %s616 = scalar_lea.sflag [#allocation4], %s615
        %s617 = sand.u32 %s165, 1
        %s618 = smul.addr %s617, 8
        %s619 = scalar_lea.vmem [#allocation3], %s618
        // Predicated region
        $region45: #{tpu_custom_call.1} parent=39 // pred_check
          %p620 = pneg %p175
        $region46: #{tpu_custom_call.1} parent=39 // pred_check_branch
          %622 = sbr.rel (%p620) target = $region48
        $region47: #{tpu_custom_call.1} parent=39 // pred_region
          %s624 = ssub.s32 128, 128
          %625 = vsyncadd %s616, %s624
          %s626 = sadd.s32 %s24, %s23
          %s627 = smul.addr %s626, 128
          %s628 = scalar_lea.hbm %s5, %s627
          %s630 = sshll.u32 %s619, 4
          %s631 = int_to_ptr.vmem [resolvable:$true] %s630
          %633 = dma.vmem_to_hbm [thread:$0]  %s631, 128, %s628, %s616
        $region48: #{tpu_custom_call.1} parent=39 // pred_fallthru
          _
      $region40: #{tpu_custom_call.1} parent=5 // pred_fallthru
        _
      %p634 = scmp.le.s32.totalorder 2, %s14
      // Predicated region
      $region49: #{tpu_custom_call.1} parent=5 // pred_check
        %p635 = pneg %p634
      $region50: #{tpu_custom_call.1} parent=5 // pred_check_branch
        %637 = sbr.rel (%p635) target = $region52
      $region51: #{tpu_custom_call.1} parent=5 // pred_region
        %s638 = ssub.s32 %s14, 2
        // Predicated region
        $region53: #{tpu_custom_call.1} parent=51 // pred_check
          %p639 = pneg %p181
        $region54: #{tpu_custom_call.1} parent=51 // pred_check_branch
          %641 = sbr.rel (%p639) target = $region56
        $region55: #{tpu_custom_call.1} parent=51 // pred_region
          %s642 = sand.u32 %s166, 1
          %s643 = scalar_lea.sflag [#allocation4], %s642
          %s644 = sand.u32 %s166, 1
          %s645 = smul.addr %s644, 8
          %s646 = scalar_lea.vmem [#allocation3], %s645
          %647 = dma.done %s643, 128
        $region56: #{tpu_custom_call.1} parent=51 // pred_fallthru
          _
      $region52: #{tpu_custom_call.1} parent=5 // pred_fallthru
        _
    $region6: #{tpu_custom_call.1} parent=1 // loop_footer
      %s18 = sadd.s32 1, %s14
    $region7: #{tpu_custom_call.1} parent=1 // loop_footer_branch
      %13 = sbr.rel target = $region3
    $region8: #{tpu_custom_call.1} parent=1 // loop_exit
      _
    %648 = vsyncpa [#allocation4], 1
    %s649 = scalar_lea.sflag [#allocation4], 1
    %650 = vsyncpa %s649, 1

</llo_original>
